<compile_context>
chip_gen: v7x
topology: tpu7x:2x2x1
jax: 0.10.0
libtpu: 0.0.40
codegen_flags: <defaults>
</compile_context>

<pallas_src>
import jax
import jax.numpy as jnp
from jax import lax
from jax.experimental import pallas as pl
from jax.experimental.pallas import tpu as pltpu


_TK_MAX = 2048               # reduction-tile cap (multiple of 128 lanes)
_TM_MAX = 4096               # batch-tile cap (keeps the lane-dense (1, TM) output block sane)
_FAST_PATH_BYTES = 1 << 20   # below this much activation data, plain XLA wins


def _vmem_budget_bytes():
    """Generation-aware VMEM budget for this kernel (leaves headroom).

    v5e/v6e: 128 MiB physical -> ~90 MiB;  v7x: 64 MiB per TensorCore -> ~45 MiB.
    """
    try:
        cap = int(pltpu.get_tpu_info().vmem_capacity_bytes)
    except Exception:
        cap = 64 * 1024 * 1024   # conservative fallback = smallest (v7x per-TC) VMEM
    return min(int(cap * 0.70), 96 * 1024 * 1024)


def _round_up(x, m):
    return ((x + m - 1) // m) * m


def _pick_tiles(B, D, dtype_bytes, budget):
    """Choose (TM, TK) so two double-buffered x tiles + small pieces fit `budget`."""
    reserve = 4 * 1024 * 1024                          # weight/output/acc buffers + slack
    per_x_buffer = max((budget - reserve) // 2, 1024 * 1024)

    # Reduction tile: full extent when small; otherwise a multiple of 128, preferring one
    # that divides D exactly so the kernel's ragged-K mask is compiled out entirely.
    if D <= _TK_MAX:
        tk = D
    else:
        tk = _TK_MAX
        for cand in range(_TK_MAX, 511, -128):
            if D % cand == 0:
                tk = cand
                break

    # Batch tile: as many rows as the per-buffer budget allows.
    max_rows = max(per_x_buffer // (tk * dtype_bytes), 8)
    if B <= max_rows and B <= _TM_MAX:
        tm = B
        # v7x megacore: with a "parallel" batch axis, a single M tile idles one of the two
        # TensorCores; split large batches into >= 2 tiles (one extra cheap step elsewhere).
        if B >= 256:
            tm = _round_up(pl.cdiv(B, 2), 128)
    else:
        tm = max(128, (min(max_rows, _TM_MAX) // 128) * 128)
    return tm, tk


def _make_kernel(D, tk):
    rem = D % tk   # 0 => K tiles divide D evenly; ragged-K masking is compiled out.

    def kernel(x_ref, w_ref, o_ref, acc_ref):
        # x_ref: (TM, TK)  w_ref: (1, TK)  o_ref: (1, TM) lane-dense  acc_ref: (1, TM) f32
        k = pl.program_id(1)
        last_k = pl.num_programs(1) - 1

        @pl.when(k == 0)
        def _init():
            acc_ref[...] = jnp.zeros_like(acc_ref)

        x = x_ref[...]
        w = w_ref[...]
        if rem:
            # Ragged last reduction tile: zero the padded K columns of BOTH operands so
            # stale VMEM contents (possibly Inf/NaN) never reach the accumulator.
            valid = jnp.where(k == last_k, rem, tk)
            x = jnp.where(lax.broadcasted_iota(jnp.int32, x.shape, 1) < valid, x, 0.0)
            w = jnp.where(lax.broadcasted_iota(jnp.int32, w.shape, 1) < valid, w, 0.0)

        # (1, TK) x (TM, TK)^T -> (1, TM): batch lands on the 128-lane axis, so the output
        # store is wide and unmasked.  f32 accumulation on the MXU.
        acc_ref[...] += lax.dot_general(
            w, x,
            dimension_numbers=(((1,), (1,)), ((), ())),
            preferred_element_type=jnp.float32,
        )

        @pl.when(k == last_k)
        def _store():
            o_ref[...] = acc_ref[...].astype(o_ref.dtype)

    return kernel


def linear_forward(x, weight, *, force_kernel=False):
    """x: (B, D);  weight: (1, D) (PyTorch nn.Linear layout, no bias)  ->  (B, 1)."""
    B, D = x.shape
    assert weight.shape == (1, D)
    dtype_bytes = jnp.dtype(x.dtype).itemsize

    # Small-input fast path: kernel launch + DMA setup dominate at tiny shapes.
    if not force_kernel and B * D * dtype_bytes < _FAST_PATH_BYTES:
        return x @ weight.T

    budget = _vmem_budget_bytes()
    tm, tk = _pick_tiles(B, D, dtype_bytes, budget)
    grid = (pl.cdiv(B, tm), pl.cdiv(D, tk))

    out_flat = pl.pallas_call(
        _make_kernel(D, tk),
        out_shape=jax.ShapeDtypeStruct((1, B), x.dtype),    # lane-dense: batch on lanes
        grid_spec=pltpu.PrefetchScalarGridSpec(
            num_scalar_prefetch=0,
            grid=grid,
            in_specs=[
                pl.BlockSpec((tm, tk), lambda i, k: (i, k)),   # stream x over batch & K
                pl.BlockSpec((1, tk), lambda i, k: (0, k)),    # weight tile (tiny)
            ],
            out_specs=pl.BlockSpec((1, tm), lambda i, k: (0, i)),
            scratch_shapes=[pltpu.VMEM((1, tm), jnp.float32)],  # f32 accumulator
        ),
        compiler_params=pltpu.CompilerParams(
            dimension_semantics=("parallel", "arbitrary"),
            vmem_limit_bytes=int(budget),
        ),
        cost_estimate=pl.CostEstimate(
            flops=2 * B * D,
            bytes_accessed=(B * D + D + B) * dtype_bytes,
            transcendentals=0,
        ),
    )(x, weight)

    # Match nn.Linear output layout (B, 1).
    return out_flat.reshape(B, 1)


if __name__ == "__main__":
    key = jax.random.PRNGKey(0)
    kx, kw, kx2, kw2 = jax.random.split(key, 4)

    # --- Module-default shapes (input_size=10), forced through the Pallas kernel. ---
    batch, input_size = 8, 10
    weight = 0.02 * jax.random.normal(kw, (1, input_size), dtype=jnp.float32)
    x = jax.random.normal(kx, (batch, input_size), dtype=jnp.float32)

    out = linear_forward(x, weight, force_kernel=True)
    jax.block_until_ready(out)
    ref = x @ weight.T
    assert out.shape == (batch, 1)
    assert jnp.allclose(out, ref, atol=1e-4, rtol=1e-4)

    # Fast path (tiny shapes bypass the kernel) must match too.
    out_fast = linear_forward(x, weight)
    assert jnp.allclose(out_fast, ref, atol=1e-5, rtol=1e-5)

    # --- Larger shape exercising multi-tile batch ("parallel") and ragged K-tiling. ---
    B2, D2 = 384, 2176   # D2 = 17*128: no >=512 multiple-of-128 divisor => masked-K path
    weight2 = 0.02 * jax.random.normal(kw2, (1, D2), dtype=jnp.float32)
    x2 = jax.random.normal(kx2, (B2, D2), dtype=jnp.float32)
    out2 = linear_forward(x2, weight2)
    jax.block_until_ready(out2)
    ref2 = x2 @ weight2.T
    assert out2.shape == (B2, 1)
    assert jnp.allclose(out2, ref2, atol=1e-3, rtol=1e-3)

    print("KERNEL_OK")
</pallas_src>

<mosaic_0001>
module attributes {stable_mosaic.version = 11 : i64} {
  func.func @kernel(%arg0: i32, %arg1: i32, %arg2: memref<8x10xf32, #tpu.memory_space<vmem>>, %arg3: memref<1x10xf32, #tpu.memory_space<vmem>>, %arg4: memref<1x8xf32, #tpu.memory_space<vmem>>, %arg5: memref<1x8xf32, #tpu.memory_space<vmem>>) attributes {dimension_semantics = [#tpu.dimension_semantics<parallel>, #tpu.dimension_semantics<arbitrary>], iteration_bounds = array<i64: 1, 1>, scalar_prefetch = 0 : i64, scratch_operands = 1 : i64, tpu.core_type = #tpu.core_type<tc>, window_params = [{transform_indices = @transform_0, window_bounds = array<i64: 8, 10>}, {transform_indices = @transform_1, window_bounds = array<i64: 1, 10>}, {transform_indices = @transform_2, window_bounds = array<i64: 1, 8>}]} {
    %c0_i32 = arith.constant 0 : i32
    %0 = arith.cmpi eq, %arg1, %c0_i32 : i32
    %1 = arith.extui %0 : i1 to i32
    %c0_i32_0 = arith.constant 0 : i32
    %2 = arith.cmpi ne, %1, %c0_i32_0 : i32
    scf.if %2 {
      %cst_10 = arith.constant 0.000000e+00 : f32
      %12 = vector.broadcast %cst_10 : f32 to vector<1x8xf32>
      %c0_11 = arith.constant 0 : index
      %c0_12 = arith.constant 0 : index
      %13 = vector.load %arg5[%c0_11, %c0_12] : memref<1x8xf32, #tpu.memory_space<vmem>>, vector<1x8xf32>
      tpu.vector_store %arg5[%c0_11, %c0_12], %12 {strides = array<i32>} : memref<1x8xf32, #tpu.memory_space<vmem>>, vector<1x8xf32>,
    } else {
    }
    %c0 = arith.constant 0 : index
    %c0_1 = arith.constant 0 : index
    %3 = vector.load %arg2[%c0, %c0_1] : memref<8x10xf32, #tpu.memory_space<vmem>>, vector<8x10xf32>
    %c0_2 = arith.constant 0 : index
    %c0_3 = arith.constant 0 : index
    %4 = vector.load %arg3[%c0_2, %c0_3] : memref<1x10xf32, #tpu.memory_space<vmem>>, vector<1x10xf32>
    %c0_4 = arith.constant 0 : index
    %c0_5 = arith.constant 0 : index
    %5 = vector.load %arg5[%c0_4, %c0_5] : memref<1x8xf32, #tpu.memory_space<vmem>>, vector<1x8xf32>
    %cst = arith.constant dense<0.000000e+00> : vector<1x8xf32>
    %6 = tpu.matmul %4, %3, %cst {dimension_numbers = #tpu.dot_dimension_numbers<[1], [1], [0], [0], [0, 0, 1, 0], [], []>} : vector<1x10xf32>, vector<8x10xf32>, vector<1x8xf32> -> vector<1x8xf32>
    %7 = arith.addf %5, %6 : vector<1x8xf32>
    %c0_6 = arith.constant 0 : index
    %c0_7 = arith.constant 0 : index
    %8 = vector.load %arg5[%c0_6, %c0_7] : memref<1x8xf32, #tpu.memory_space<vmem>>, vector<1x8xf32>
    tpu.vector_store %arg5[%c0_6, %c0_7], %7 {strides = array<i32>} : memref<1x8xf32, #tpu.memory_space<vmem>>, vector<1x8xf32>,
    %c0_i32_8 = arith.constant 0 : i32
    %9 = arith.cmpi eq, %arg1, %c0_i32_8 : i32
    %10 = arith.extui %9 : i1 to i32
    %c0_i32_9 = arith.constant 0 : i32
    %11 = arith.cmpi ne, %10, %c0_i32_9 : i32
    scf.if %11 {
      %c0_10 = arith.constant 0 : index
      %c0_11 = arith.constant 0 : index
      %12 = vector.load %arg5[%c0_10, %c0_11] : memref<1x8xf32, #tpu.memory_space<vmem>>, vector<1x8xf32>
      %c0_12 = arith.constant 0 : index
      %c0_13 = arith.constant 0 : index
      %13 = vector.load %arg4[%c0_12, %c0_13] : memref<1x8xf32, #tpu.memory_space<vmem>>, vector<1x8xf32>
      tpu.vector_store %arg4[%c0_12, %c0_13], %12 {strides = array<i32>} : memref<1x8xf32, #tpu.memory_space<vmem>>, vector<1x8xf32>,
    } else {
    }
    return
  }
  func.func @transform_0(%arg0: i32, %arg1: i32) -> (i32, i32) {
    %c0_i32 = arith.constant 0 : i32
    return %arg0, %arg1 : i32, i32
  }
  func.func @transform_1(%arg0: i32, %arg1: i32) -> (i32, i32) {
    %c0_i32 = arith.constant 0 : i32
    %c0_i32_0 = arith.constant 0 : i32
    return %c0_i32, %arg1 : i32, i32
  }
  func.func @transform_2(%arg0: i32, %arg1: i32) -> (i32, i32) {
    %c0_i32 = arith.constant 0 : i32
    %c0_i32_0 = arith.constant 0 : i32
    return %c0_i32, %arg0 : i32, i32
  }
}

</mosaic_0001>

<llo_original>
// kernel: tpu_custom_call.1
$region0: #{tpu_custom_call.1}
  #allocation0 [shape = 'u32[]', space=smem, size = 0x4, offset = 0x4, fixed_abs, tag = 'smem constant byte address 0x4 - core index']
  #allocation1 [shape = 'u32[144,128]{1,0:T(1,128)}', space=vmem, size = 0x12000, scoped, tag = 'internal scratch']
  #allocation2 [shape = 'f32[1,8]{1,0:T(1,128)}', space=vmem, size = 0x200, scoped, tag = 'scratch operand']
  %s0 = inlined_call_operand.hbm [shape: f32[8,10], index: 0, kind: input, shape index: {}]
  %s1 = inlined_call_operand.vmem [shape: f32[1,10], index: 1, kind: input, shape index: {}]
  %s2 = inlined_call_operand.hbm [shape: f32[1,8], index: 2, kind: output, shape index: {}]
  %s3 = sld [smem:[#allocation0]]
  $region30: #{tpu_custom_call.1} parent=0
    _
  %s5 = ssub.s32 1, %s3
  %s6 = scalar_select 0, %s5, %s3
  $region1: #{tpu_custom_call.1} parent=0
    #allocation3 [shape = 'u8[4096]{0}', space=vmem, size = 0x1000, scoped, tag = 'input window, operand 0, single buffered']
    #allocation4 [shape = 's32[1]{0}', space=sflag, size = 0x4, scoped, tag = 'scoped memory for tpu_custom_call.1']
    #allocation5 [shape = 's32[1]{0}', space=sflag, size = 0x4, scoped, tag = 'scoped memory for tpu_custom_call.1']
    #allocation6 [shape = 'u8[512]{0}', space=vmem, size = 0x400, scoped, tag = 'output window, operand 0, single buffered']
    %7 = vsyncpa [#allocation4], 0
    %8 = vsyncpa [#allocation5], 0
    // Predicated region
    $region2: #{tpu_custom_call.1} parent=1 // pred_check
      _
    $region3: #{tpu_custom_call.1} parent=1 // pred_check_branch
      %10 = sbr.rel (0) target = $region5
    $region4: #{tpu_custom_call.1} parent=1 // pred_region
      %s12 = ssub.s32 128, 128
      %13 = vsyncadd [#allocation4], %s12
      %s15 = sshll.u32 [#allocation3], 4
      %s16 = int_to_ptr.vmem [resolvable:$true] %s15
      %18 = dma.hbm_to_vmem [thread:$0]  %s0, 128, %s16, [#allocation4]
    $region5: #{tpu_custom_call.1} parent=1 // pred_fallthru
      _
    // Predicated region
    $region6: #{tpu_custom_call.1} parent=1 // pred_check
      _
    $region7: #{tpu_custom_call.1} parent=1 // pred_check_branch
      %20 = sbr.rel (0) target = $region9
    $region8: #{tpu_custom_call.1} parent=1 // pred_region
      _
    $region9: #{tpu_custom_call.1} parent=1 // pred_fallthru
      _
    // Predicated region
    $region10: #{tpu_custom_call.1} parent=1 // pred_check
      _
    $region11: #{tpu_custom_call.1} parent=1 // pred_check_branch
      %22 = sbr.rel (0) target = $region13
    $region12: #{tpu_custom_call.1} parent=1 // pred_region
      %23 = dma.done [#allocation4], 128
    $region13: #{tpu_custom_call.1} parent=1 // pred_fallthru
      _
    %p24 = scmp.eq.s32.totalorder 0, 0
    // Predicated region
    $region14: #{tpu_custom_call.1} parent=1 // pred_check
      %p25 = pneg %p24
    $region15: #{tpu_custom_call.1} parent=1 // pred_check_branch
      %27 = sbr.rel (%p25) target = $region17
    $region16: #{tpu_custom_call.1} parent=1 // pred_region
      %vm28 = vcmask 57344
      %29 = vst.msk [vmem:[#allocation2] sm:$0x1] %vm28, 0.0
    $region17: #{tpu_custom_call.1} parent=1 // pred_fallthru
      _
    %v30 = vld [vmem:[#allocation3] sm:$0xff]
    %v31 = vld [vmem:[%s1] sm:$0x1]
    %v32 = vld [vmem:[#allocation2] sm:$0x1]
    %vm33 = vcmask 80896
    %v35 = vsel %vm33, %v31, 0
    %v38 = vsel %vm33, %v30, 0
    %40 = vmatprep.subr.mxu0 0.0
    %41 = vmatpush1.xpose.msra.mxu0 %v38
    %42 = vmatprep.subr.mxu0 0.0
    %43 = vmatpush1.xpose.msra.mxu0 0.0
    %44 = vmatprep.subr.mxu0 0.0
    %45 = vmatpush1.xpose.msra.mxu0 0.0
    %46 = vmatprep.subr.mxu0 0.0
    %47 = vmatpush1.xpose.msra.mxu0 0.0
    %48 = vmatprep.subr.mxu0 0.0
    %49 = vmatpush1.xpose.msra.mxu0 0.0
    %50 = vmatprep.subr.mxu0 0.0
    %51 = vmatpush1.xpose.msra.mxu0 0.0
    %52 = vmatprep.subr.mxu0 0.0
    %53 = vmatpush1.xpose.msra.mxu0 0.0
    %54 = vmatprep.subr.mxu0 0.0
    %55 = vmatpush1.xpose.msra.mxu0 0.0
    %56 = vmatprep.subr.mxu0 0.0
    %57 = vmatpush1.xpose.msra.mxu0 0.0
    %58 = vmatprep.subr.mxu0 0.0
    %59 = vmatpush1.xpose.msra.mxu0 0.0
    %60 = vmatprep.subr.mxu0 0.0
    %61 = vmatpush1.xpose.msra.mxu0 0.0
    %62 = vmatprep.subr.mxu0 0.0
    %63 = vmatpush1.xpose.msra.mxu0 0.0
    %64 = vmatprep.subr.mxu0 0.0
    %65 = vmatpush1.xpose.msra.mxu0 0.0
    %66 = vmatprep.subr.mxu0 0.0
    %67 = vmatpush1.xpose.msra.mxu0 0.0
    %68 = vmatprep.subr.mxu0 0.0
    %69 = vmatpush1.xpose.msra.mxu0 0.0
    %70 = vmatprep.subr.mxu0 0.0
    %71 = vmatpush1.xpose.msra.mxu0 0.0
    %72 = vmatprep.subr.mxu0 0.0
    %73 = vmatpush1.xpose.msra.mxu0 0.0
    %74 = vmatprep.subr.mxu0 0.0
    %75 = vmatpush1.xpose.msra.mxu0 0.0
    %76 = vmatprep.subr.mxu0 0.0
    %77 = vmatpush1.xpose.msra.mxu0 0.0
    %78 = vmatprep.subr.mxu0 0.0
    %79 = vmatpush1.xpose.msra.mxu0 0.0
    %80 = vmatprep.subr.mxu0 0.0
    %81 = vmatpush1.xpose.msra.mxu0 0.0
    %82 = vmatprep.subr.mxu0 0.0
    %83 = vmatpush1.xpose.msra.mxu0 0.0
    %84 = vmatprep.subr.mxu0 0.0
    %85 = vmatpush1.xpose.msra.mxu0 0.0
    %86 = vmatprep.subr.mxu0 0.0
    %87 = vmatpush1.xpose.msra.mxu0 0.0
    %88 = vmatprep.subr.mxu0 0.0
    %89 = vmatpush1.xpose.msra.mxu0 0.0
    %90 = vmatprep.subr.mxu0 0.0
    %91 = vmatpush1.xpose.msra.mxu0 0.0
    %92 = vmatprep.subr.mxu0 0.0
    %93 = vmatpush1.xpose.msra.mxu0 0.0
    %94 = vmatprep.subr.mxu0 0.0
    %95 = vmatpush1.xpose.msra.mxu0 0.0
    %96 = vmatprep.subr.mxu0 0.0
    %97 = vmatpush1.xpose.msra.mxu0 0.0
    %98 = vmatprep.subr.mxu0 0.0
    %99 = vmatpush1.xpose.msra.mxu0 0.0
    %100 = vmatprep.subr.mxu0 0.0
    %101 = vmatpush1.xpose.msra.mxu0 0.0
    %102 = vmatprep.subr.mxu0 0.0
    %103 = vmatpush1.xpose.msra.mxu0 0.0
    %104 = vmatprep.mubr.f32.mxu0 0.0
    %105 = vmatmul.mubr.f32.gmra.mrb[0].mxu0 %v35
    %v106 = vpop.f32.mrb[0].mxu0
    %v107 = vadd.f32 0.0, %v106
    %v108 = vpop.f32.mrb[0].mxu0
    %109 = vdwg.mxu0
    %v110 = vadd.f32 %v32, %v107
    %vm111 = vcmask 57344
    %112 = vst.msk [vmem:[#allocation2] sm:$0x1] %vm111, %v110
    // Predicated region
    $region18: #{tpu_custom_call.1} parent=1 // pred_check
      %p113 = pneg %p24
    $region19: #{tpu_custom_call.1} parent=1 // pred_check_branch
      %115 = sbr.rel (%p113) target = $region21
    $region20: #{tpu_custom_call.1} parent=1 // pred_region
      %v116 = vld [vmem:[#allocation2] sm:$0x1]
      %117 = vst.msk [vmem:[#allocation6] sm:$0x1] %vm111, %v116
    $region21: #{tpu_custom_call.1} parent=1 // pred_fallthru
      _
    // Predicated region
    $region22: #{tpu_custom_call.1} parent=1 // pred_check
      _
    $region23: #{tpu_custom_call.1} parent=1 // pred_check_branch
      %119 = sbr.rel (0) target = $region25
    $region24: #{tpu_custom_call.1} parent=1 // pred_region
      %s121 = ssub.s32 16, 16
      %122 = vsyncadd [#allocation5], %s121
      %s124 = sshll.u32 [#allocation6], 4
      %s125 = int_to_ptr.vmem [resolvable:$true] %s124
      %127 = dma.vmem_to_hbm [thread:$0]  %s125, 16, %s2, [#allocation5]
    $region25: #{tpu_custom_call.1} parent=1 // pred_fallthru
      _
    // Predicated region
    $region26: #{tpu_custom_call.1} parent=1 // pred_check
      _
    $region27: #{tpu_custom_call.1} parent=1 // pred_check_branch
      %129 = sbr.rel (0) target = $region29
    $region28: #{tpu_custom_call.1} parent=1 // pred_region
      %130 = dma.done [#allocation5], 16
    $region29: #{tpu_custom_call.1} parent=1 // pred_fallthru
      _
    %131 = vsyncpa [#allocation4], 1
    %132 = vsyncpa [#allocation5], 1

</llo_original>
